<compile_context>
chip_gen: v7x
topology: tpu7x:2x2x1
jax: 0.10.0
libtpu: 0.0.40
codegen_flags: <defaults>
</compile_context>

<pallas_src>
import numpy as np
import jax
import jax.numpy as jnp
from jax.experimental import pallas as pl
from jax.experimental.pallas import tpu as pltpu


# ---------------------------------------------------------------------------
# Pallas kernel: one row-tile of X -> one row-tile of the output.
#   o = x + z      (z broadcast over rows)
# ---------------------------------------------------------------------------
def _mdp_kernel(x_ref, z_ref, o_ref):
    # x_ref: (tile_n, D), z_ref: (1, D) -> broadcast add on the VPU.
    o_ref[...] = x_ref[...] + z_ref[...]


def mdp_add(x_flat, z, *, tile_n=512):
    """x_flat: (N, D) f32, z: (1, D) f32 -> (N, D) f32 = x_flat + z."""
    N, D = x_flat.shape

    # Sublane-align the tile and never make it larger than the (padded) input.
    tile_n = max(8, (int(tile_n) // 8) * 8)
    n_pad8 = ((N + 7) // 8) * 8
    tile_n = min(tile_n, n_pad8)

    # Pad rows so the grid covers N exactly (padded rows are sliced off below).
    n_pad = ((N + tile_n - 1) // tile_n) * tile_n
    if n_pad != N:
        x_flat = jnp.pad(x_flat, ((0, n_pad - N), (0, 0)))

    grid = (n_pad // tile_n,)
    out = pl.pallas_call(
        _mdp_kernel,
        out_shape=jax.ShapeDtypeStruct((n_pad, D), x_flat.dtype),
        grid_spec=pltpu.PrefetchScalarGridSpec(
            num_scalar_prefetch=0,
            grid=grid,
            in_specs=[
                pl.BlockSpec((tile_n, D), lambda i: (i, 0)),   # x row-tile
                pl.BlockSpec((1, D), lambda i: (0, 0)),        # z (whole, resident)
            ],
            out_specs=pl.BlockSpec((tile_n, D), lambda i: (i, 0)),
        ),
        compiler_params=pltpu.CompilerParams(
            dimension_semantics=("parallel",),
            vmem_limit_bytes=48 * 1024 * 1024,
        ),
    )(x_flat, z)
    return out[:N]


# ---------------------------------------------------------------------------
# MDP module (JAX) — noise sampling in plain JAX, hot path (the add) in Pallas.
# ---------------------------------------------------------------------------
class MDP:
    def __init__(self, eps, embs_dim=300):
        self.embs_dim = embs_dim
        self.eps = eps

    def sample_z(self, key):
        """z = l * (v / ||v||), l ~ Gamma(embs_dim, rate=eps), v ~ N(0, I)."""
        k_v, k_l = jax.random.split(key)
        v = jax.random.normal(k_v, (self.embs_dim,), dtype=jnp.float32)
        v1 = v / jnp.maximum(jnp.linalg.norm(v), 1e-12)   # F.normalize(p=2, eps=1e-12)
        # torch Gamma(concentration, rate): standard_gamma(concentration) / rate
        l = jax.random.gamma(k_l, float(self.embs_dim), dtype=jnp.float32) / self.eps
        return (l * v1).reshape(1, self.embs_dim).astype(jnp.float32)

    def forward(self, embs, key):
        """embs: (B, L, D) float32.  Deterministic given `key`."""
        B, L, D = embs.shape
        assert D == self.embs_dim
        z = self.sample_z(key)                                   # (1, D)
        x_flat = embs.reshape(B * L, D).astype(jnp.float32)
        out_flat = mdp_add(x_flat, z, tile_n=512)
        return out_flat.reshape(B, L, D)


if __name__ == "__main__":
    # Small shapes: batch=2, seq=8, embs_dim=32
    B, L, D = 2, 8, 32
    eps = 1.0

    key = jax.random.PRNGKey(0)
    k_in, k_noise = jax.random.split(key)
    embs = jax.random.normal(k_in, (B, L, D), dtype=jnp.float32)

    mod = MDP(eps=eps, embs_dim=D)
    out = mod.forward(embs, k_noise)
    out = jax.block_until_ready(out)

    # Reference check (pure JAX) with the identical noise vector z.
    z_ref = mod.sample_z(k_noise).reshape(D)
    ref = embs + z_ref

    assert out.shape == (B, L, D)
    np.testing.assert_allclose(np.asarray(out), np.asarray(ref), rtol=1e-6, atol=1e-6)
    print("KERNEL_OK")
</pallas_src>

<mosaic_0001>
module attributes {stable_mosaic.version = 11 : i64} {
  func.func @_mdp_kernel(%arg0: i32, %arg1: memref<16x32xf32, #tpu.memory_space<vmem>>, %arg2: memref<1x32xf32, #tpu.memory_space<vmem>>, %arg3: memref<16x32xf32, #tpu.memory_space<vmem>>) attributes {dimension_semantics = [#tpu.dimension_semantics<parallel>], iteration_bounds = array<i64: 1>, scalar_prefetch = 0 : i64, scratch_operands = 0 : i64, tpu.core_type = #tpu.core_type<tc>, window_params = [{transform_indices = @transform_0, window_bounds = array<i64: 16, 32>}, {pipeline_mode = #tpu.pipeline_mode<synchronous>, transform_indices = @transform_1, window_bounds = array<i64: 1, 32>}, {transform_indices = @transform_2, window_bounds = array<i64: 16, 32>}]} {
    %c0 = arith.constant 0 : index
    %c0_0 = arith.constant 0 : index
    %0 = vector.load %arg1[%c0, %c0_0] : memref<16x32xf32, #tpu.memory_space<vmem>>, vector<16x32xf32>
    %c0_1 = arith.constant 0 : index
    %c0_2 = arith.constant 0 : index
    %1 = vector.load %arg2[%c0_1, %c0_2] : memref<1x32xf32, #tpu.memory_space<vmem>>, vector<1x32xf32>
    %2 = vector.broadcast %1 : vector<1x32xf32> to vector<16x32xf32>
    %3 = arith.addf %0, %2 : vector<16x32xf32>
    %c0_3 = arith.constant 0 : index
    %c0_4 = arith.constant 0 : index
    %4 = vector.load %arg3[%c0_3, %c0_4] : memref<16x32xf32, #tpu.memory_space<vmem>>, vector<16x32xf32>
    tpu.vector_store %arg3[%c0_3, %c0_4], %3 {strides = array<i32>} : memref<16x32xf32, #tpu.memory_space<vmem>>, vector<16x32xf32>,
    return
  }
  func.func @transform_0(%arg0: i32) -> (i32, i32) {
    %c0_i32 = arith.constant 0 : i32
    %c0_i32_0 = arith.constant 0 : i32
    return %arg0, %c0_i32 : i32, i32
  }
  func.func @transform_1(%arg0: i32) -> (i32, i32) {
    %c0_i32 = arith.constant 0 : i32
    %c0_i32_0 = arith.constant 0 : i32
    %c0_i32_1 = arith.constant 0 : i32
    return %c0_i32, %c0_i32_0 : i32, i32
  }
  func.func @transform_2(%arg0: i32) -> (i32, i32) {
    %c0_i32 = arith.constant 0 : i32
    %c0_i32_0 = arith.constant 0 : i32
    return %arg0, %c0_i32 : i32, i32
  }
}

</mosaic_0001>

<llo_original>
// kernel: tpu_custom_call.1
$region0: #{tpu_custom_call.1}
  #allocation0 [shape = 'u32[]', space=smem, size = 0x4, offset = 0x4, fixed_abs, tag = 'smem constant byte address 0x4 - core index']
  #allocation1 [shape = 'u32[144,128]{1,0:T(1,128)}', space=vmem, size = 0x12000, scoped, tag = 'internal scratch']
  %s0 = inlined_call_operand.hbm [shape: f32[16,32], index: 0, kind: input, shape index: {}]
  %s1 = inlined_call_operand.vmem [shape: f32[1,32], index: 1, kind: input, shape index: {}]
  %s2 = inlined_call_operand.hbm [shape: f32[16,32], index: 2, kind: output, shape index: {}]
  %s3 = sld [smem:[#allocation0]]
  $region22: #{tpu_custom_call.1} parent=0
    _
  %s5 = ssub.s32 1, %s3
  %s6 = scalar_select 0, %s5, %s3
  $region1: #{tpu_custom_call.1} parent=0
    #allocation2 [shape = 'u8[8192]{0}', space=vmem, size = 0x2000, scoped, tag = 'input window, operand 0, single buffered']
    #allocation3 [shape = 's32[1]{0}', space=sflag, size = 0x4, scoped, tag = 'scoped memory for tpu_custom_call.1']
    #allocation4 [shape = 's32[1]{0}', space=sflag, size = 0x4, scoped, tag = 'scoped memory for tpu_custom_call.1']
    #allocation5 [shape = 'u8[8192]{0}', space=vmem, size = 0x2000, scoped, tag = 'output window, operand 0, single buffered']
    %7 = vsyncpa [#allocation3], 0
    %8 = vsyncpa [#allocation4], 0
    // Predicated region
    $region2: #{tpu_custom_call.1} parent=1 // pred_check
      _
    $region3: #{tpu_custom_call.1} parent=1 // pred_check_branch
      %10 = sbr.rel (0) target = $region5
    $region4: #{tpu_custom_call.1} parent=1 // pred_region
      %s12 = ssub.s32 256, 256
      %13 = vsyncadd [#allocation3], %s12
      %s14 = sshll.u32 [#allocation2], 4
      %s15 = int_to_ptr.vmem [resolvable:$true] %s14
      %20 = dma.hbm_to_vmem [thread:$0]  %s0, 256, %s15, [#allocation3], 128, 128, 8
    $region5: #{tpu_custom_call.1} parent=1 // pred_fallthru
      _
    // Predicated region
    $region6: #{tpu_custom_call.1} parent=1 // pred_check
      _
    $region7: #{tpu_custom_call.1} parent=1 // pred_check_branch
      %22 = sbr.rel (0) target = $region9
    $region8: #{tpu_custom_call.1} parent=1 // pred_region
      _
    $region9: #{tpu_custom_call.1} parent=1 // pred_fallthru
      _
    // Predicated region
    $region10: #{tpu_custom_call.1} parent=1 // pred_check
      _
    $region11: #{tpu_custom_call.1} parent=1 // pred_check_branch
      %24 = sbr.rel (0) target = $region13
    $region12: #{tpu_custom_call.1} parent=1 // pred_region
      %25 = dma.done [#allocation3], 256
    $region13: #{tpu_custom_call.1} parent=1 // pred_fallthru
      _
    %v26 = vld [vmem:[#allocation2] sm:$0xff]
    %v27 = vld [vmem:[#allocation2 + $0x8] sm:$0xff]
    %v28 = vld [vmem:[%s1] sm:$0x1]
    %v30 = vlaneseq
    %v31 = vshrl.u32 %v30, 7
    %v32 = vsub.s32 0, %v31
    %v33 = vrot.slane %v28, %v32
    %v35 = vadd.f32 %v26, %v33
    %v36 = vadd.f32 %v27, %v33
    %vm37 = vcmask 261120
    %38 = vst.msk [vmem:[#allocation5] sm:$0xff] %vm37, %v35
    %39 = vst.msk [vmem:[#allocation5 + $0x8] sm:$0xff] %vm37, %v36
    // Predicated region
    $region14: #{tpu_custom_call.1} parent=1 // pred_check
      _
    $region15: #{tpu_custom_call.1} parent=1 // pred_check_branch
      %41 = sbr.rel (0) target = $region17
    $region16: #{tpu_custom_call.1} parent=1 // pred_region
      %s43 = ssub.s32 256, 256
      %44 = vsyncadd [#allocation4], %s43
      %s45 = sshll.u32 [#allocation5], 4
      %s46 = int_to_ptr.vmem [resolvable:$true] %s45
      %51 = dma.vmem_to_hbm [thread:$0]  %s46, 256, %s2, [#allocation4], 128, 128, 8
    $region17: #{tpu_custom_call.1} parent=1 // pred_fallthru
      _
    // Predicated region
    $region18: #{tpu_custom_call.1} parent=1 // pred_check
      _
    $region19: #{tpu_custom_call.1} parent=1 // pred_check_branch
      %53 = sbr.rel (0) target = $region21
    $region20: #{tpu_custom_call.1} parent=1 // pred_region
      %54 = dma.done [#allocation4], 256
    $region21: #{tpu_custom_call.1} parent=1 // pred_fallthru
      _
    %55 = vsyncpa [#allocation3], 1
    %56 = vsyncpa [#allocation4], 1

</llo_original>
